<compile_context>
chip_gen: v7x
topology: tpu7x:2x2x1
jax: 0.10.0
libtpu: 0.0.40
codegen_flags: <defaults>
</compile_context>

<pallas_src>
import functools

import numpy as np
import jax
import jax.numpy as jnp
from jax.experimental import pallas as pl
from jax.experimental.pallas import tpu as pltpu


def q_net_kernel(self_ref, surr_ref, w1_ref, b1_ref, w2_ref, b2_ref,
                 wq1a_ref, wq1b_ref, bq1_ref, wq2_ref, bq2_ref,
                 o_ref, *, num_states):
    """One batch tile in transposed ("feature x batch") layout, all f32.

    self_ref : [car_dim, Bt]              f32  (batch on the lane axis)
    surr_ref : [num_states, car_dim, Bt]  f32
    w*_ref   : transposed weights, f32
    b*_ref   : [out_features, 1]          f32 column biases
    o_ref    : [action_dim, Bt]           f32 (lane-dense store)
    """
    out2 = w2_ref.shape[0]
    bt = self_ref.shape[1]

    # Per-sample sum over surrounding states.  num_states is small & static
    # -> fully unrolled; every column (batch element) is independent.
    summed = jnp.zeros((out2, bt), jnp.float32)
    for j in range(num_states):
        sj = surr_ref[j]                                          # [car_dim, Bt]
        # torch: `if -1 not in state` -> state used iff no element equals -1.
        # Exact f32 comparison; small sublane reduce (cheap in this layout).
        valid = jnp.all(sj != -1.0, axis=0, keepdims=True).astype(jnp.float32)

        h = jnp.maximum(
            jnp.dot(w1_ref[...], sj, preferred_element_type=jnp.float32)
            + b1_ref[...], 0.0)                                   # [hid, Bt]
        phi = jnp.maximum(
            jnp.dot(w2_ref[...], h, preferred_element_type=jnp.float32)
            + b2_ref[...], 0.0)                                   # [out2, Bt]
        summed = summed + phi * valid

    # Q layer 1 on concat([self, summed]) -- concat avoided by splitting WQ1
    # along its input axis (a sublane-axis concat would cost XLU shifts here).
    hq = jnp.maximum(
        jnp.dot(wq1a_ref[...], self_ref[...], preferred_element_type=jnp.float32)
        + jnp.dot(wq1b_ref[...], summed, preferred_element_type=jnp.float32)
        + bq1_ref[...], 0.0)                                      # [hid, Bt]

    # Q layer 2 (Identity output activation); lane-dense [action_dim, Bt] store.
    o_ref[...] = (jnp.dot(wq2_ref[...], hq, preferred_element_type=jnp.float32)
                  + bq2_ref[...]).astype(o_ref.dtype)


@functools.partial(jax.jit,
                   static_argnames=("car_dim", "num_states", "action_dim", "block_b"))
def q_net_forward(s, params, *, car_dim, num_states, action_dim, block_b=512):
    """Pallas wrapper.  s: [B, car_dim + num_states*car_dim] float32."""
    W1, b1, W2, b2, WQ1, bq1, WQ2, bq2 = params
    B, d_in = s.shape
    assert d_in == car_dim * (1 + num_states)

    # Lane-dense layout: batch on the lane axis; all f32.
    self_t = s[:, :car_dim].T                                   # [car_dim, B]
    surr_t = jnp.transpose(
        s[:, car_dim:].reshape(B, num_states, car_dim), (1, 2, 0))  # [ns, car_dim, B]

    # Transposed weights; biases as column vectors.
    w1t = W1.T                                                  # [hid,  car_dim]
    w2t = W2.T                                                  # [out2, hid]
    wq1at = WQ1[:car_dim, :].T                                  # [hid,  car_dim]
    wq1bt = WQ1[car_dim:, :].T                                  # [hid,  out2]
    wq2t = WQ2.T                                                # [act,  hid]
    b1t, b2t = b1.reshape(-1, 1), b2.reshape(-1, 1)
    bq1t, bq2t = bq1.reshape(-1, 1), bq2.reshape(-1, 1)

    # Batch tile: last block dim must be a multiple of 128 or equal the full B.
    bb = min(block_b, B)
    if bb % 128 != 0:
        bb = B
    grid = (pl.cdiv(B, bb),)

    def resident(a):  # weights/biases stay resident across all grid steps
        nd = a.ndim
        return pl.BlockSpec(a.shape, lambda i, _n=nd: (0,) * _n)

    kernel = functools.partial(q_net_kernel, num_states=num_states)

    out_t = pl.pallas_call(
        kernel,
        out_shape=jax.ShapeDtypeStruct((action_dim, B), jnp.float32),
        grid_spec=pltpu.PrefetchScalarGridSpec(
            num_scalar_prefetch=0,
            grid=grid,
            in_specs=[pl.BlockSpec((car_dim, bb), lambda i: (0, i)),
                      pl.BlockSpec((num_states, car_dim, bb), lambda i: (0, 0, i)),
                      resident(w1t), resident(b1t),
                      resident(w2t), resident(b2t),
                      resident(wq1at), resident(wq1bt), resident(bq1t),
                      resident(wq2t), resident(bq2t)],
            out_specs=pl.BlockSpec((action_dim, bb), lambda i: (0, i))),
        compiler_params=pltpu.CompilerParams(
            dimension_semantics=("parallel",),     # shard batch tiles across TCs
            vmem_limit_bytes=32 * 1024 * 1024),    # working set per tile << 1 MiB
    )(self_t, surr_t, w1t, b1t, w2t, b2t, wq1at, wq1bt, bq1t, wq2t, bq2t)

    return out_t.T                                              # [B, action_dim]


def q_net_reference(s, params, *, car_dim):
    """Pure-JAX f32 reference of the PyTorch loop semantics (vectorized)."""
    W1, b1, W2, b2, WQ1, bq1, WQ2, bq2 = params
    B = s.shape[0]
    self_states = s[:, :car_dim]
    surr = s[:, car_dim:].reshape(B, -1, car_dim)
    valid = jnp.all(surr != -1.0, axis=-1, keepdims=True).astype(jnp.float32)
    h = jax.nn.relu(jnp.dot(surr, W1, preferred_element_type=jnp.float32) + b1)
    phi = jax.nn.relu(jnp.dot(h, W2, preferred_element_type=jnp.float32) + b2)
    summed = jnp.sum(phi * valid, axis=1)
    hq = jax.nn.relu(
        jnp.dot(self_states, WQ1[:car_dim], preferred_element_type=jnp.float32)
        + jnp.dot(summed, WQ1[car_dim:], preferred_element_type=jnp.float32)
        + bq1)
    return jnp.dot(hq, WQ2, preferred_element_type=jnp.float32) + bq2


if __name__ == "__main__":
    # args-equivalent config (small, consistent with the module):
    car_dim = 4            # args.car_dim
    ESC_max_agent = 3      # args.ESC_max_agent
    num_states = 3         # surrounding agents present in s
    hid_shape = 32
    action_dim = 5
    out2 = 1 + car_dim * ESC_max_agent          # s_net_hidden2 output size = 13
    q_in = car_dim + out2                       # Q-net input size (use_ESC=True) = 17

    key = jax.random.PRNGKey(0)
    ks = jax.random.split(key, 10)

    def init_linear(kw, kb, fan_in, fan_out):
        bound = 1.0 / np.sqrt(fan_in)           # PyTorch-style uniform bound
        W = jax.random.uniform(kw, (fan_in, fan_out), jnp.float32, -bound, bound)
        b = jax.random.uniform(kb, (1, fan_out), jnp.float32, -bound, bound)
        return W, b

    W1, b1 = init_linear(ks[0], ks[1], car_dim, hid_shape)       # s_net_hidden1
    W2, b2 = init_linear(ks[2], ks[3], hid_shape, out2)          # s_net_hidden2
    WQ1, bq1 = init_linear(ks[4], ks[5], q_in, hid_shape)        # Q layer 1
    WQ2, bq2 = init_linear(ks[6], ks[7], hid_shape, action_dim)  # Q layer 2
    params = (W1, b1, W2, b2, WQ1, bq1, WQ2, bq2)

    def make_input(k, batch):
        s = jax.random.uniform(k, (batch, car_dim + num_states * car_dim),
                               jnp.float32, -0.9, 0.9)
        # mark some surrounding states "absent" (all -1) to exercise the masking
        absent = ((jnp.arange(batch)[:, None] + jnp.arange(num_states)[None, :]) % 3) == 0
        surr = s[:, car_dim:].reshape(batch, num_states, car_dim)
        surr = jnp.where(absent[:, :, None], -1.0, surr)
        return jnp.concatenate([s[:, :car_dim], surr.reshape(batch, -1)], axis=1)

    def check(s):
        out = jax.block_until_ready(
            q_net_forward(s, params, car_dim=car_dim, num_states=num_states,
                          action_dim=action_dim))
        out = np.asarray(out)
        assert out.shape == (s.shape[0], action_dim)
        ref = np.asarray(q_net_reference(s, params, car_dim=car_dim))
        # Only possible divergence is MXU matmul rounding at default precision;
        # operand magnitudes are O(1)-O(10) here.
        assert np.allclose(out, ref, atol=1e-1, rtol=1e-1), (
            "Pallas kernel diverges from f32 reference")

    # Small case (B=2): single block, exercises the -1 masking path.
    check(make_input(ks[8], 2))
    # Larger case (B=640): multi-step grid (512-row tiles), weights resident,
    # boundary block only partially valid.
    check(make_input(ks[9], 640))

    print("KERNEL_OK")
</pallas_src>

<mosaic_0001>
module attributes {stable_mosaic.version = 11 : i64} {
  func.func @q_net_kernel(%arg0: i32, %arg1: memref<4x2xf32, #tpu.memory_space<vmem>>, %arg2: memref<3x4x2xf32, #tpu.memory_space<vmem>>, %arg3: memref<32x4xf32, #tpu.memory_space<vmem>>, %arg4: memref<32x1xf32, #tpu.memory_space<vmem>>, %arg5: memref<13x32xf32, #tpu.memory_space<vmem>>, %arg6: memref<13x1xf32, #tpu.memory_space<vmem>>, %arg7: memref<32x4xf32, #tpu.memory_space<vmem>>, %arg8: memref<32x13xf32, #tpu.memory_space<vmem>>, %arg9: memref<32x1xf32, #tpu.memory_space<vmem>>, %arg10: memref<5x32xf32, #tpu.memory_space<vmem>>, %arg11: memref<5x1xf32, #tpu.memory_space<vmem>>, %arg12: memref<5x2xf32, #tpu.memory_space<vmem>>) attributes {dimension_semantics = [#tpu.dimension_semantics<parallel>], iteration_bounds = array<i64: 1>, scalar_prefetch = 0 : i64, scratch_operands = 0 : i64, tpu.core_type = #tpu.core_type<tc>, window_params = [{transform_indices = @transform_0, window_bounds = array<i64: 4, 2>}, {transform_indices = @transform_1, window_bounds = array<i64: 3, 4, 2>}, {pipeline_mode = #tpu.pipeline_mode<synchronous>, transform_indices = @transform_2, window_bounds = array<i64: 32, 4>}, {pipeline_mode = #tpu.pipeline_mode<synchronous>, transform_indices = @transform_3, window_bounds = array<i64: 32, 1>}, {pipeline_mode = #tpu.pipeline_mode<synchronous>, transform_indices = @transform_4, window_bounds = array<i64: 13, 32>}, {pipeline_mode = #tpu.pipeline_mode<synchronous>, transform_indices = @transform_5, window_bounds = array<i64: 13, 1>}, {pipeline_mode = #tpu.pipeline_mode<synchronous>, transform_indices = @transform_6, window_bounds = array<i64: 32, 4>}, {pipeline_mode = #tpu.pipeline_mode<synchronous>, transform_indices = @transform_7, window_bounds = array<i64: 32, 13>}, {pipeline_mode = #tpu.pipeline_mode<synchronous>, transform_indices = @transform_8, window_bounds = array<i64: 32, 1>}, {pipeline_mode = #tpu.pipeline_mode<synchronous>, transform_indices = @transform_9, window_bounds = array<i64: 5, 32>}, {pipeline_mode = #tpu.pipeline_mode<synchronous>, transform_indices = @transform_10, window_bounds = array<i64: 5, 1>}, {transform_indices = @transform_11, window_bounds = array<i64: 5, 2>}]} {
    %cst = arith.constant 0.000000e+00 : f32
    %0 = vector.broadcast %cst : f32 to vector<13x2xf32>
    %c0 = arith.constant 0 : index
    %c0_0 = arith.constant 0 : index
    %c0_1 = arith.constant 0 : index
    %1 = vector.load %arg2[%c0, %c0_0, %c0_1] : memref<3x4x2xf32, #tpu.memory_space<vmem>>, vector<1x4x2xf32>
    %2 = vector.shape_cast %1 : vector<1x4x2xf32> to vector<4x2xf32>
    %cst_2 = arith.constant -1.000000e+00 : f32
    %3 = vector.broadcast %cst_2 : f32 to vector<4x2xf32>
    %4 = arith.cmpf one, %2, %3 : vector<4x2xf32>
    %cst_3 = arith.constant 1.000000e+00 : f32
    %cst_4 = arith.constant 0.000000e+00 : f32
    %5 = vector.broadcast %cst_3 : f32 to vector<4x2xf32>
    %6 = vector.broadcast %cst_4 : f32 to vector<4x2xf32>
    %7 = arith.select %4, %5, %6 : vector<4x2xi1>, vector<4x2xf32>
    %cst_5 = arith.constant dense<0x7F800000> : vector<2xf32>
    %8 = vector.multi_reduction <minimumf>, %7, %cst_5 [0] : vector<4x2xf32> to vector<2xf32>
    %cst_6 = arith.constant 0.000000e+00 : f32
    %9 = vector.broadcast %cst_6 : f32 to vector<2xf32>
    %10 = arith.cmpf ogt, %8, %9 : vector<2xf32>
    %11 = vector.shape_cast %10 : vector<2xi1> to vector<1x2xi1>
    %12 = arith.extui %11 : vector<1x2xi1> to vector<1x2xi32>
    %13 = arith.sitofp %12 : vector<1x2xi32> to vector<1x2xf32>
    %c0_7 = arith.constant 0 : index
    %c0_8 = arith.constant 0 : index
    %14 = vector.load %arg3[%c0_7, %c0_8] : memref<32x4xf32, #tpu.memory_space<vmem>>, vector<32x4xf32>
    %cst_9 = arith.constant dense<0.000000e+00> : vector<32x2xf32>
    %15 = tpu.matmul %14, %2, %cst_9 {dimension_numbers = #tpu.dot_dimension_numbers<[1], [0], [0], [1], [0, 0, 1, 1], [], []>} : vector<32x4xf32>, vector<4x2xf32>, vector<32x2xf32> -> vector<32x2xf32>
    %c0_10 = arith.constant 0 : index
    %c0_11 = arith.constant 0 : index
    %16 = vector.load %arg4[%c0_10, %c0_11] : memref<32x1xf32, #tpu.memory_space<vmem>>, vector<32x1xf32>
    %17 = vector.broadcast %16 : vector<32x1xf32> to vector<32x2xf32>
    %18 = arith.addf %15, %17 : vector<32x2xf32>
    %cst_12 = arith.constant 0.000000e+00 : f32
    %19 = vector.broadcast %cst_12 : f32 to vector<32x2xf32>
    %20 = arith.maximumf %18, %19 : vector<32x2xf32>
    %c0_13 = arith.constant 0 : index
    %c0_14 = arith.constant 0 : index
    %21 = vector.load %arg5[%c0_13, %c0_14] : memref<13x32xf32, #tpu.memory_space<vmem>>, vector<13x32xf32>
    %cst_15 = arith.constant dense<0.000000e+00> : vector<13x2xf32>
    %22 = tpu.matmul %21, %20, %cst_15 {dimension_numbers = #tpu.dot_dimension_numbers<[1], [0], [0], [1], [0, 0, 1, 1], [], []>} : vector<13x32xf32>, vector<32x2xf32>, vector<13x2xf32> -> vector<13x2xf32>
    %c0_16 = arith.constant 0 : index
    %c0_17 = arith.constant 0 : index
    %23 = vector.load %arg6[%c0_16, %c0_17] : memref<13x1xf32, #tpu.memory_space<vmem>>, vector<13x1xf32>
    %24 = vector.broadcast %23 : vector<13x1xf32> to vector<13x2xf32>
    %25 = arith.addf %22, %24 : vector<13x2xf32>
    %cst_18 = arith.constant 0.000000e+00 : f32
    %26 = vector.broadcast %cst_18 : f32 to vector<13x2xf32>
    %27 = arith.maximumf %25, %26 : vector<13x2xf32>
    %28 = vector.broadcast %13 : vector<1x2xf32> to vector<13x2xf32>
    %29 = arith.mulf %27, %28 : vector<13x2xf32>
    %30 = arith.addf %0, %29 : vector<13x2xf32>
    %c1 = arith.constant 1 : index
    %c0_19 = arith.constant 0 : index
    %c0_20 = arith.constant 0 : index
    %31 = vector.load %arg2[%c1, %c0_19, %c0_20] : memref<3x4x2xf32, #tpu.memory_space<vmem>>, vector<1x4x2xf32>
    %32 = vector.shape_cast %31 : vector<1x4x2xf32> to vector<4x2xf32>
    %cst_21 = arith.constant -1.000000e+00 : f32
    %33 = vector.broadcast %cst_21 : f32 to vector<4x2xf32>
    %34 = arith.cmpf one, %32, %33 : vector<4x2xf32>
    %cst_22 = arith.constant 1.000000e+00 : f32
    %cst_23 = arith.constant 0.000000e+00 : f32
    %35 = vector.broadcast %cst_22 : f32 to vector<4x2xf32>
    %36 = vector.broadcast %cst_23 : f32 to vector<4x2xf32>
    %37 = arith.select %34, %35, %36 : vector<4x2xi1>, vector<4x2xf32>
    %cst_24 = arith.constant dense<0x7F800000> : vector<2xf32>
    %38 = vector.multi_reduction <minimumf>, %37, %cst_24 [0] : vector<4x2xf32> to vector<2xf32>
    %cst_25 = arith.constant 0.000000e+00 : f32
    %39 = vector.broadcast %cst_25 : f32 to vector<2xf32>
    %40 = arith.cmpf ogt, %38, %39 : vector<2xf32>
    %41 = vector.shape_cast %40 : vector<2xi1> to vector<1x2xi1>
    %42 = arith.extui %41 : vector<1x2xi1> to vector<1x2xi32>
    %43 = arith.sitofp %42 : vector<1x2xi32> to vector<1x2xf32>
    %c0_26 = arith.constant 0 : index
    %c0_27 = arith.constant 0 : index
    %44 = vector.load %arg3[%c0_26, %c0_27] : memref<32x4xf32, #tpu.memory_space<vmem>>, vector<32x4xf32>
    %cst_28 = arith.constant dense<0.000000e+00> : vector<32x2xf32>
    %45 = tpu.matmul %44, %32, %cst_28 {dimension_numbers = #tpu.dot_dimension_numbers<[1], [0], [0], [1], [0, 0, 1, 1], [], []>} : vector<32x4xf32>, vector<4x2xf32>, vector<32x2xf32> -> vector<32x2xf32>
    %c0_29 = arith.constant 0 : index
    %c0_30 = arith.constant 0 : index
    %46 = vector.load %arg4[%c0_29, %c0_30] : memref<32x1xf32, #tpu.memory_space<vmem>>, vector<32x1xf32>
    %47 = vector.broadcast %46 : vector<32x1xf32> to vector<32x2xf32>
    %48 = arith.addf %45, %47 : vector<32x2xf32>
    %cst_31 = arith.constant 0.000000e+00 : f32
    %49 = vector.broadcast %cst_31 : f32 to vector<32x2xf32>
    %50 = arith.maximumf %48, %49 : vector<32x2xf32>
    %c0_32 = arith.constant 0 : index
    %c0_33 = arith.constant 0 : index
    %51 = vector.load %arg5[%c0_32, %c0_33] : memref<13x32xf32, #tpu.memory_space<vmem>>, vector<13x32xf32>
    %cst_34 = arith.constant dense<0.000000e+00> : vector<13x2xf32>
    %52 = tpu.matmul %51, %50, %cst_34 {dimension_numbers = #tpu.dot_dimension_numbers<[1], [0], [0], [1], [0, 0, 1, 1], [], []>} : vector<13x32xf32>, vector<32x2xf32>, vector<13x2xf32> -> vector<13x2xf32>
    %c0_35 = arith.constant 0 : index
    %c0_36 = arith.constant 0 : index
    %53 = vector.load %arg6[%c0_35, %c0_36] : memref<13x1xf32, #tpu.memory_space<vmem>>, vector<13x1xf32>
    %54 = vector.broadcast %53 : vector<13x1xf32> to vector<13x2xf32>
    %55 = arith.addf %52, %54 : vector<13x2xf32>
    %cst_37 = arith.constant 0.000000e+00 : f32
    %56 = vector.broadcast %cst_37 : f32 to vector<13x2xf32>
    %57 = arith.maximumf %55, %56 : vector<13x2xf32>
    %58 = vector.broadcast %43 : vector<1x2xf32> to vector<13x2xf32>
    %59 = arith.mulf %57, %58 : vector<13x2xf32>
    %60 = arith.addf %30, %59 : vector<13x2xf32>
    %c2 = arith.constant 2 : index
    %c0_38 = arith.constant 0 : index
    %c0_39 = arith.constant 0 : index
    %61 = vector.load %arg2[%c2, %c0_38, %c0_39] : memref<3x4x2xf32, #tpu.memory_space<vmem>>, vector<1x4x2xf32>
    %62 = vector.shape_cast %61 : vector<1x4x2xf32> to vector<4x2xf32>
    %cst_40 = arith.constant -1.000000e+00 : f32
    %63 = vector.broadcast %cst_40 : f32 to vector<4x2xf32>
    %64 = arith.cmpf one, %62, %63 : vector<4x2xf32>
    %cst_41 = arith.constant 1.000000e+00 : f32
    %cst_42 = arith.constant 0.000000e+00 : f32
    %65 = vector.broadcast %cst_41 : f32 to vector<4x2xf32>
    %66 = vector.broadcast %cst_42 : f32 to vector<4x2xf32>
    %67 = arith.select %64, %65, %66 : vector<4x2xi1>, vector<4x2xf32>
    %cst_43 = arith.constant dense<0x7F800000> : vector<2xf32>
    %68 = vector.multi_reduction <minimumf>, %67, %cst_43 [0] : vector<4x2xf32> to vector<2xf32>
    %cst_44 = arith.constant 0.000000e+00 : f32
    %69 = vector.broadcast %cst_44 : f32 to vector<2xf32>
    %70 = arith.cmpf ogt, %68, %69 : vector<2xf32>
    %71 = vector.shape_cast %70 : vector<2xi1> to vector<1x2xi1>
    %72 = arith.extui %71 : vector<1x2xi1> to vector<1x2xi32>
    %73 = arith.sitofp %72 : vector<1x2xi32> to vector<1x2xf32>
    %c0_45 = arith.constant 0 : index
    %c0_46 = arith.constant 0 : index
    %74 = vector.load %arg3[%c0_45, %c0_46] : memref<32x4xf32, #tpu.memory_space<vmem>>, vector<32x4xf32>
    %cst_47 = arith.constant dense<0.000000e+00> : vector<32x2xf32>
    %75 = tpu.matmul %74, %62, %cst_47 {dimension_numbers = #tpu.dot_dimension_numbers<[1], [0], [0], [1], [0, 0, 1, 1], [], []>} : vector<32x4xf32>, vector<4x2xf32>, vector<32x2xf32> -> vector<32x2xf32>
    %c0_48 = arith.constant 0 : index
    %c0_49 = arith.constant 0 : index
    %76 = vector.load %arg4[%c0_48, %c0_49] : memref<32x1xf32, #tpu.memory_space<vmem>>, vector<32x1xf32>
    %77 = vector.broadcast %76 : vector<32x1xf32> to vector<32x2xf32>
    %78 = arith.addf %75, %77 : vector<32x2xf32>
    %cst_50 = arith.constant 0.000000e+00 : f32
    %79 = vector.broadcast %cst_50 : f32 to vector<32x2xf32>
    %80 = arith.maximumf %78, %79 : vector<32x2xf32>
    %c0_51 = arith.constant 0 : index
    %c0_52 = arith.constant 0 : index
    %81 = vector.load %arg5[%c0_51, %c0_52] : memref<13x32xf32, #tpu.memory_space<vmem>>, vector<13x32xf32>
    %cst_53 = arith.constant dense<0.000000e+00> : vector<13x2xf32>
    %82 = tpu.matmul %81, %80, %cst_53 {dimension_numbers = #tpu.dot_dimension_numbers<[1], [0], [0], [1], [0, 0, 1, 1], [], []>} : vector<13x32xf32>, vector<32x2xf32>, vector<13x2xf32> -> vector<13x2xf32>
    %c0_54 = arith.constant 0 : index
    %c0_55 = arith.constant 0 : index
    %83 = vector.load %arg6[%c0_54, %c0_55] : memref<13x1xf32, #tpu.memory_space<vmem>>, vector<13x1xf32>
    %84 = vector.broadcast %83 : vector<13x1xf32> to vector<13x2xf32>
    %85 = arith.addf %82, %84 : vector<13x2xf32>
    %cst_56 = arith.constant 0.000000e+00 : f32
    %86 = vector.broadcast %cst_56 : f32 to vector<13x2xf32>
    %87 = arith.maximumf %85, %86 : vector<13x2xf32>
    %88 = vector.broadcast %73 : vector<1x2xf32> to vector<13x2xf32>
    %89 = arith.mulf %87, %88 : vector<13x2xf32>
    %90 = arith.addf %60, %89 : vector<13x2xf32>
    %c0_57 = arith.constant 0 : index
    %c0_58 = arith.constant 0 : index
    %91 = vector.load %arg7[%c0_57, %c0_58] : memref<32x4xf32, #tpu.memory_space<vmem>>, vector<32x4xf32>
    %c0_59 = arith.constant 0 : index
    %c0_60 = arith.constant 0 : index
    %92 = vector.load %arg1[%c0_59, %c0_60] : memref<4x2xf32, #tpu.memory_space<vmem>>, vector<4x2xf32>
    %cst_61 = arith.constant dense<0.000000e+00> : vector<32x2xf32>
    %93 = tpu.matmul %91, %92, %cst_61 {dimension_numbers = #tpu.dot_dimension_numbers<[1], [0], [0], [1], [0, 0, 1, 1], [], []>} : vector<32x4xf32>, vector<4x2xf32>, vector<32x2xf32> -> vector<32x2xf32>
    %c0_62 = arith.constant 0 : index
    %c0_63 = arith.constant 0 : index
    %94 = vector.load %arg8[%c0_62, %c0_63] : memref<32x13xf32, #tpu.memory_space<vmem>>, vector<32x13xf32>
    %cst_64 = arith.constant dense<0.000000e+00> : vector<32x2xf32>
    %95 = tpu.matmul %94, %90, %cst_64 {dimension_numbers = #tpu.dot_dimension_numbers<[1], [0], [0], [1], [0, 0, 1, 1], [], []>} : vector<32x13xf32>, vector<13x2xf32>, vector<32x2xf32> -> vector<32x2xf32>
    %96 = arith.addf %93, %95 : vector<32x2xf32>
    %c0_65 = arith.constant 0 : index
    %c0_66 = arith.constant 0 : index
    %97 = vector.load %arg9[%c0_65, %c0_66] : memref<32x1xf32, #tpu.memory_space<vmem>>, vector<32x1xf32>
    %98 = vector.broadcast %97 : vector<32x1xf32> to vector<32x2xf32>
    %99 = arith.addf %96, %98 : vector<32x2xf32>
    %cst_67 = arith.constant 0.000000e+00 : f32
    %100 = vector.broadcast %cst_67 : f32 to vector<32x2xf32>
    %101 = arith.maximumf %99, %100 : vector<32x2xf32>
    %c0_68 = arith.constant 0 : index
    %c0_69 = arith.constant 0 : index
    %102 = vector.load %arg10[%c0_68, %c0_69] : memref<5x32xf32, #tpu.memory_space<vmem>>, vector<5x32xf32>
    %cst_70 = arith.constant dense<0.000000e+00> : vector<5x2xf32>
    %103 = tpu.matmul %102, %101, %cst_70 {dimension_numbers = #tpu.dot_dimension_numbers<[1], [0], [0], [1], [0, 0, 1, 1], [], []>} : vector<5x32xf32>, vector<32x2xf32>, vector<5x2xf32> -> vector<5x2xf32>
    %c0_71 = arith.constant 0 : index
    %c0_72 = arith.constant 0 : index
    %104 = vector.load %arg11[%c0_71, %c0_72] : memref<5x1xf32, #tpu.memory_space<vmem>>, vector<5x1xf32>
    %105 = vector.broadcast %104 : vector<5x1xf32> to vector<5x2xf32>
    %106 = arith.addf %103, %105 : vector<5x2xf32>
    %c0_73 = arith.constant 0 : index
    %c0_74 = arith.constant 0 : index
    %107 = vector.load %arg12[%c0_73, %c0_74] : memref<5x2xf32, #tpu.memory_space<vmem>>, vector<5x2xf32>
    tpu.vector_store %arg12[%c0_73, %c0_74], %106 {strides = array<i32>} : memref<5x2xf32, #tpu.memory_space<vmem>>, vector<5x2xf32>,
    return
  }
  func.func @transform_0(%arg0: i32) -> (i32, i32) {
    %c0_i32 = arith.constant 0 : i32
    %c0_i32_0 = arith.constant 0 : i32
    return %c0_i32, %arg0 : i32, i32
  }
  func.func @transform_1(%arg0: i32) -> (i32, i32, i32) {
    %c0_i32 = arith.constant 0 : i32
    %c0_i32_0 = arith.constant 0 : i32
    %c0_i32_1 = arith.constant 0 : i32
    return %c0_i32, %c0_i32_0, %arg0 : i32, i32, i32
  }
  func.func @transform_2(%arg0: i32) -> (i32, i32) {
    %c0_i32 = arith.constant 0 : i32
    %c0_i32_0 = arith.constant 0 : i32
    %c0_i32_1 = arith.constant 0 : i32
    return %c0_i32, %c0_i32_0 : i32, i32
  }
  func.func @transform_3(%arg0: i32) -> (i32, i32) {
    %c0_i32 = arith.constant 0 : i32
    %c0_i32_0 = arith.constant 0 : i32
    %c0_i32_1 = arith.constant 0 : i32
    return %c0_i32, %c0_i32_0 : i32, i32
  }
  func.func @transform_4(%arg0: i32) -> (i32, i32) {
    %c0_i32 = arith.constant 0 : i32
    %c0_i32_0 = arith.constant 0 : i32
    %c0_i32_1 = arith.constant 0 : i32
    return %c0_i32, %c0_i32_0 : i32, i32
  }
  func.func @transform_5(%arg0: i32) -> (i32, i32) {
    %c0_i32 = arith.constant 0 : i32
    %c0_i32_0 = arith.constant 0 : i32
    %c0_i32_1 = arith.constant 0 : i32
    return %c0_i32, %c0_i32_0 : i32, i32
  }
  func.func @transform_6(%arg0: i32) -> (i32, i32) {
    %c0_i32 = arith.constant 0 : i32
    %c0_i32_0 = arith.constant 0 : i32
    %c0_i32_1 = arith.constant 0 : i32
    return %c0_i32, %c0_i32_0 : i32, i32
  }
  func.func @transform_7(%arg0: i32) -> (i32, i32) {
    %c0_i32 = arith.constant 0 : i32
    %c0_i32_0 = arith.constant 0 : i32
    %c0_i32_1 = arith.constant 0 : i32
    return %c0_i32, %c0_i32_0 : i32, i32
  }
  func.func @transform_8(%arg0: i32) -> (i32, i32) {
    %c0_i32 = arith.constant 0 : i32
    %c0_i32_0 = arith.constant 0 : i32
    %c0_i32_1 = arith.constant 0 : i32
    return %c0_i32, %c0_i32_0 : i32, i32
  }
  func.func @transform_9(%arg0: i32) -> (i32, i32) {
    %c0_i32 = arith.constant 0 : i32
    %c0_i32_0 = arith.constant 0 : i32
    %c0_i32_1 = arith.constant 0 : i32
    return %c0_i32, %c0_i32_0 : i32, i32
  }
  func.func @transform_10(%arg0: i32) -> (i32, i32) {
    %c0_i32 = arith.constant 0 : i32
    %c0_i32_0 = arith.constant 0 : i32
    %c0_i32_1 = arith.constant 0 : i32
    return %c0_i32, %c0_i32_0 : i32, i32
  }
  func.func @transform_11(%arg0: i32) -> (i32, i32) {
    %c0_i32 = arith.constant 0 : i32
    %c0_i32_0 = arith.constant 0 : i32
    return %c0_i32, %arg0 : i32, i32
  }
}

</mosaic_0001>

<llo_original>
// kernel: q_net_forward.1
$region0: #{q_net_forward.1}
  #allocation0 [shape = 'u32[]', space=smem, size = 0x4, offset = 0x4, fixed_abs, tag = 'smem constant byte address 0x4 - core index']
  #allocation1 [shape = 'u32[144,128]{1,0:T(1,128)}', space=vmem, size = 0x12000, scoped, tag = 'internal scratch']
  %s0 = inlined_call_operand.vmem [shape: f32[4,2], index: 0, kind: input, shape index: {}]
  %s1 = inlined_call_operand.vmem [shape: f32[3,4,2], index: 1, kind: input, shape index: {}]
  %s2 = inlined_call_operand.vmem [shape: f32[32,4], index: 2, kind: input, shape index: {}]
  %s3 = inlined_call_operand.vmem [shape: f32[32,1], index: 3, kind: input, shape index: {}]
  %s4 = inlined_call_operand.vmem [shape: f32[13,32], index: 4, kind: input, shape index: {}]
  %s5 = inlined_call_operand.vmem [shape: f32[13,1], index: 5, kind: input, shape index: {}]
  %s6 = inlined_call_operand.vmem [shape: f32[32,4], index: 6, kind: input, shape index: {}]
  %s7 = inlined_call_operand.vmem [shape: f32[32,13], index: 7, kind: input, shape index: {}]
  %s8 = inlined_call_operand.vmem [shape: f32[32,1], index: 8, kind: input, shape index: {}]
  %s9 = inlined_call_operand.vmem [shape: f32[5,32], index: 9, kind: input, shape index: {}]
  %s10 = inlined_call_operand.vmem [shape: f32[5,1], index: 10, kind: input, shape index: {}]
  %s11 = inlined_call_operand.vmem [shape: f32[5,2], index: 11, kind: output, shape index: {}]
  %s12 = sld [smem:[#allocation0]]
  $region54: #{q_net_forward.1} parent=0
    _
  %s14 = ssub.s32 1, %s12
  %s15 = scalar_select 0, %s14, %s12
  // Predicated region
  $region2: #{q_net_forward.1} parent=0 // pred_check
    _
  $region3: #{q_net_forward.1} parent=0 // pred_check_branch
    %17 = sbr.rel (0) target = $region5
  $region4: #{q_net_forward.1} parent=0 // pred_region
    _
  $region5: #{q_net_forward.1} parent=0 // pred_fallthru
    _
  // Predicated region
  $region6: #{q_net_forward.1} parent=0 // pred_check
    _
  $region7: #{q_net_forward.1} parent=0 // pred_check_branch
    %19 = sbr.rel (0) target = $region9
  $region8: #{q_net_forward.1} parent=0 // pred_region
    _
  $region9: #{q_net_forward.1} parent=0 // pred_fallthru
    _
  // Predicated region
  $region10: #{q_net_forward.1} parent=0 // pred_check
    _
  $region11: #{q_net_forward.1} parent=0 // pred_check_branch
    %21 = sbr.rel (0) target = $region13
  $region12: #{q_net_forward.1} parent=0 // pred_region
    _
  $region13: #{q_net_forward.1} parent=0 // pred_fallthru
    _
  // Predicated region
  $region14: #{q_net_forward.1} parent=0 // pred_check
    _
  $region15: #{q_net_forward.1} parent=0 // pred_check_branch
    %23 = sbr.rel (0) target = $region17
  $region16: #{q_net_forward.1} parent=0 // pred_region
    _
  $region17: #{q_net_forward.1} parent=0 // pred_fallthru
    _
  // Predicated region
  $region18: #{q_net_forward.1} parent=0 // pred_check
    _
  $region19: #{q_net_forward.1} parent=0 // pred_check_branch
    %25 = sbr.rel (0) target = $region21
  $region20: #{q_net_forward.1} parent=0 // pred_region
    _
  $region21: #{q_net_forward.1} parent=0 // pred_fallthru
    _
  // Predicated region
  $region22: #{q_net_forward.1} parent=0 // pred_check
    _
  $region23: #{q_net_forward.1} parent=0 // pred_check_branch
    %27 = sbr.rel (0) target = $region25
  $region24: #{q_net_forward.1} parent=0 // pred_region
    _
  $region25: #{q_net_forward.1} parent=0 // pred_fallthru
    _
  // Predicated region
  $region26: #{q_net_forward.1} parent=0 // pred_check
    _
  $region27: #{q_net_forward.1} parent=0 // pred_check_branch
    %29 = sbr.rel (0) target = $region29
  $region28: #{q_net_forward.1} parent=0 // pred_region
    _
  $region29: #{q_net_forward.1} parent=0 // pred_fallthru
    _
  // Predicated region
  $region30: #{q_net_forward.1} parent=0 // pred_check
    _
  $region31: #{q_net_forward.1} parent=0 // pred_check_branch
    %31 = sbr.rel (0) target = $region33
  $region32: #{q_net_forward.1} parent=0 // pred_region
    _
  $region33: #{q_net_forward.1} parent=0 // pred_fallthru
    _
  // Predicated region
  $region34: #{q_net_forward.1} parent=0 // pred_check
    _
  $region35: #{q_net_forward.1} parent=0 // pred_check_branch
    %33 = sbr.rel (0) target = $region37
  $region36: #{q_net_forward.1} parent=0 // pred_region
    _
  $region37: #{q_net_forward.1} parent=0 // pred_fallthru
    _
  // Predicated region
  $region38: #{q_net_forward.1} parent=0 // pred_check
    _
  $region39: #{q_net_forward.1} parent=0 // pred_check_branch
    %35 = sbr.rel (0) target = $region41
  $region40: #{q_net_forward.1} parent=0 // pred_region
    _
  $region41: #{q_net_forward.1} parent=0 // pred_fallthru
    _
  // Predicated region
  $region42: #{q_net_forward.1} parent=0 // pred_check
    _
  $region43: #{q_net_forward.1} parent=0 // pred_check_branch
    %37 = sbr.rel (0) target = $region45
  $region44: #{q_net_forward.1} parent=0 // pred_region
    _
  $region45: #{q_net_forward.1} parent=0 // pred_fallthru
    _
  %v38 = vld [vmem:[%s1] sm:$0xf]
  %vm39 = vcmp.ne.f32.partialorder %v38, -1.0
  %v40 = vsel %vm39, 1.0, 0.0
  %vm41 = vcmask 11264
  %v42 = vsel %vm41, %v40, inf
  %v43 = vrot.slane %v42, 4
  %v44 = vmin.f32 %v42, %v43
  %v45 = vrot.slane %v44, 2
  %v46 = vmin.f32 %v44, %v45
  %v47 = vrot.slane %v46, 1
  %v48 = vmin.f32 %v46, %v47
  %vm49 = vcmp.gt.f32.partialorder %v48, 0.0
  %v50 = vsel %vm49, 1, 0
  %v51 = vcvt.s32.f32 %v50
  %v52 = vld [vmem:[%s2] sm:$0xff]
  %v53 = vld [vmem:[%s2 + $0x8] sm:$0xff]
  %v54 = vld [vmem:[%s2 + $0x10] sm:$0xff]
  %v55 = vld [vmem:[%s2 + $0x18] sm:$0xff]
  %v56 = vld [vmem:[%s3] sm:$0xff]
  %v57 = vld [vmem:[%s3 + $0x8] sm:$0xff]
  %v58 = vld [vmem:[%s3 + $0x10] sm:$0xff]
  %v59 = vld [vmem:[%s3 + $0x18] sm:$0xff]
  %61 = vset.pattern.permute.xlu0 0
  %62 = vperm.xlu0 %61, %v56
  %v63 = vpop.permute.xlu0 %62
  %66 = vset.pattern.permute.xlu0 0
  %67 = vperm.xlu0 %66, %v57
  %v68 = vpop.permute.xlu0 %67
  %71 = vset.pattern.permute.xlu0 0
  %72 = vperm.xlu0 %71, %v58
  %v73 = vpop.permute.xlu0 %72
  %76 = vset.pattern.permute.xlu0 0
  %77 = vperm.xlu0 %76, %v59
  %v78 = vpop.permute.xlu0 %77
  %vm80 = vcmask 31744
  %v82 = vsel %vm80, %v52, 0
  %v85 = vsel %vm80, %v53, 0
  %v88 = vsel %vm80, %v54, 0
  %v91 = vsel %vm80, %v55, 0
  %vm93 = vcmask 1043456
  %v95 = vsel %vm93, %v38, 0
  %97 = vmatprep.subr.mxu0 0.0
  %98 = vmatpush1.msra.mxu0 %v95
  %99 = vmatprep.subr.mxu0 0.0
  %100 = vmatpush1.msra.mxu0 0.0
  %101 = vmatprep.subr.mxu0 0.0
  %102 = vmatpush1.msra.mxu0 0.0
  %103 = vmatprep.subr.mxu0 0.0
  %104 = vmatpush1.msra.mxu0 0.0
  %105 = vmatprep.subr.mxu0 0.0
  %106 = vmatpush1.msra.mxu0 0.0
  %107 = vmatprep.subr.mxu0 0.0
  %108 = vmatpush1.msra.mxu0 0.0
  %109 = vmatprep.subr.mxu0 0.0
  %110 = vmatpush1.msra.mxu0 0.0
  %111 = vmatprep.subr.mxu0 0.0
  %112 = vmatpush1.msra.mxu0 0.0
  %113 = vmatprep.subr.mxu0 0.0
  %114 = vmatpush1.msra.mxu0 0.0
  %115 = vmatprep.subr.mxu0 0.0
  %116 = vmatpush1.msra.mxu0 0.0
  %117 = vmatprep.subr.mxu0 0.0
  %118 = vmatpush1.msra.mxu0 0.0
  %119 = vmatprep.subr.mxu0 0.0
  %120 = vmatpush1.msra.mxu0 0.0
  %121 = vmatprep.subr.mxu0 0.0
  %122 = vmatpush1.msra.mxu0 0.0
  %123 = vmatprep.subr.mxu0 0.0
  %124 = vmatpush1.msra.mxu0 0.0
  %125 = vmatprep.subr.mxu0 0.0
  %126 = vmatpush1.msra.mxu0 0.0
  %127 = vmatprep.subr.mxu0 0.0
  %128 = vmatpush1.msra.mxu0 0.0
  %129 = vmatprep.subr.mxu0 0.0
  %130 = vmatpush1.msra.mxu0 0.0
  %131 = vmatprep.subr.mxu0 0.0
  %132 = vmatpush1.msra.mxu0 0.0
  %133 = vmatprep.subr.mxu0 0.0
  %134 = vmatpush1.msra.mxu0 0.0
  %135 = vmatprep.subr.mxu0 0.0
  %136 = vmatpush1.msra.mxu0 0.0
  %137 = vmatprep.subr.mxu0 0.0
  %138 = vmatpush1.msra.mxu0 0.0
  %139 = vmatprep.subr.mxu0 0.0
  %140 = vmatpush1.msra.mxu0 0.0
  %141 = vmatprep.subr.mxu0 0.0
  %142 = vmatpush1.msra.mxu0 0.0
  %143 = vmatprep.subr.mxu0 0.0
  %144 = vmatpush1.msra.mxu0 0.0
  %145 = vmatprep.subr.mxu0 0.0
  %146 = vmatpush1.msra.mxu0 0.0
  %147 = vmatprep.subr.mxu0 0.0
  %148 = vmatpush1.msra.mxu0 0.0
  %149 = vmatprep.subr.mxu0 0.0
  %150 = vmatpush1.msra.mxu0 0.0
  %151 = vmatprep.subr.mxu0 0.0
  %152 = vmatpush1.msra.mxu0 0.0
  %153 = vmatprep.subr.mxu0 0.0
  %154 = vmatpush1.msra.mxu0 0.0
  %155 = vmatprep.subr.mxu0 0.0
  %156 = vmatpush1.msra.mxu0 0.0
  %157 = vmatprep.subr.mxu0 0.0
  %158 = vmatpush1.msra.mxu0 0.0
  %159 = vmatprep.subr.mxu0 0.0
  %160 = vmatpush1.msra.mxu0 0.0
  %161 = vmatprep.mubr.f32.mxu0 0.0
  %162 = vmatmul.mubr.f32.gmra.mrb[0].mxu0 %v82
  %v163 = vpop.f32.mrb[0].mxu0
  %v164 = vadd.f32 %v63, %v163
  %v165 = vpop.f32.mrb[0].mxu0
  %166 = vmatprep.mubr.f32.mxu0 0.0
  %167 = vmatmul.mubr.f32.gmra.mrb[0].mxu0 %v85
  %v168 = vpop.f32.mrb[0].mxu0
  %v169 = vadd.f32 %v68, %v168
  %v170 = vpop.f32.mrb[0].mxu0
  %171 = vmatprep.mubr.f32.mxu0 0.0
  %172 = vmatmul.mubr.f32.gmra.mrb[0].mxu0 %v88
  %v173 = vpop.f32.mrb[0].mxu0
  %v174 = vadd.f32 %v73, %v173
  %v175 = vpop.f32.mrb[0].mxu0
  %176 = vmatprep.mubr.f32.mxu0 0.0
  %177 = vmatmul.mubr.f32.gmra.mrb[0].mxu0 %v91
  %v178 = vpop.f32.mrb[0].mxu0
  %v179 = vadd.f32 %v78, %v178
  %v180 = vpop.f32.mrb[0].mxu0
  %181 = vdwg.mxu0
  %v182 = vmax.f32 %v164, 0.0
  %v183 = vmax.f32 %v169, 0.0
  %v184 = vmax.f32 %v174, 0.0
  %v185 = vmax.f32 %v179, 0.0
  %v186 = vld [vmem:[%s4] sm:$0xff]
  %v187 = vld [vmem:[%s4 + $0x8] sm:$0x1f]
  %v188 = vld [vmem:[%s5] sm:$0xff]
  %v189 = vld [vmem:[%s5 + $0x8] sm:$0x1f]
  %191 = vset.pattern.permute.xlu0 0
  %192 = vperm.xlu0 %191, %v188
  %v193 = vpop.permute.xlu0 %192
  %196 = vset.pattern.permute.xlu0 0
  %197 = vperm.xlu0 %196, %v189
  %v198 = vpop.permute.xlu0 %197
  %vm200 = vcmask 261120
  %v202 = vsel %vm200, %v186, 0
  %v205 = vsel %vm200, %v187, 0
  %207 = vmatprep.subr.mxu0 0.0
  %208 = vmatpush1.msra.mxu0 %v182
  %209 = vmatprep.subr.mxu0 0.0
  %210 = vmatpush1.msra.mxu0 %v183
  %211 = vmatprep.subr.mxu0 0.0
  %212 = vmatpush1.msra.mxu0 %v184
  %213 = vmatprep.subr.mxu0 0.0
  %214 = vmatpush1.msra.mxu0 %v185
  %215 = vmatprep.subr.mxu0 0.0
  %216 = vmatpush1.msra.mxu0 0.0
  %217 = vmatprep.subr.mxu0 0.0
  %218 = vmatpush1.msra.mxu0 0.0
  %219 = vmatprep.subr.mxu0 0.0
  %220 = vmatpush1.msra.mxu0 0.0
  %221 = vmatprep.subr.mxu0 0.0
  %222 = vmatpush1.msra.mxu0 0.0
  %223 = vmatprep.subr.mxu0 0.0
  %224 = vmatpush1.msra.mxu0 0.0
  %225 = vmatprep.subr.mxu0 0.0
  %226 = vmatpush1.msra.mxu0 0.0
  %227 = vmatprep.subr.mxu0 0.0
  %228 = vmatpush1.msra.mxu0 0.0
  %229 = vmatprep.subr.mxu0 0.0
  %230 = vmatpush1.msra.mxu0 0.0
  %231 = vmatprep.subr.mxu0 0.0
  %232 = vmatpush1.msra.mxu0 0.0
  %233 = vmatprep.subr.mxu0 0.0
  %234 = vmatpush1.msra.mxu0 0.0
  %235 = vmatprep.subr.mxu0 0.0
  %236 = vmatpush1.msra.mxu0 0.0
  %237 = vmatprep.subr.mxu0 0.0
  %238 = vmatpush1.msra.mxu0 0.0
  %239 = vmatprep.subr.mxu0 0.0
  %240 = vmatpush1.msra.mxu0 0.0
  %241 = vmatprep.subr.mxu0 0.0
  %242 = vmatpush1.msra.mxu0 0.0
  %243 = vmatprep.subr.mxu0 0.0
  %244 = vmatpush1.msra.mxu0 0.0
  %245 = vmatprep.subr.mxu0 0.0
  %246 = vmatpush1.msra.mxu0 0.0
  %247 = vmatprep.subr.mxu0 0.0
  %248 = vmatpush1.msra.mxu0 0.0
  %249 = vmatprep.subr.mxu0 0.0
  %250 = vmatpush1.msra.mxu0 0.0
  %251 = vmatprep.subr.mxu0 0.0
  %252 = vmatpush1.msra.mxu0 0.0
  %253 = vmatprep.subr.mxu0 0.0
  %254 = vmatpush1.msra.mxu0 0.0
  %255 = vmatprep.subr.mxu0 0.0
  %256 = vmatpush1.msra.mxu0 0.0
  %257 = vmatprep.subr.mxu0 0.0
  %258 = vmatpush1.msra.mxu0 0.0
  %259 = vmatprep.subr.mxu0 0.0
  %260 = vmatpush1.msra.mxu0 0.0
  %261 = vmatprep.subr.mxu0 0.0
  %262 = vmatpush1.msra.mxu0 0.0
  %263 = vmatprep.subr.mxu0 0.0
  %264 = vmatpush1.msra.mxu0 0.0
  %265 = vmatprep.subr.mxu0 0.0
  %266 = vmatpush1.msra.mxu0 0.0
  %267 = vmatprep.subr.mxu0 0.0
  %268 = vmatpush1.msra.mxu0 0.0
  %269 = vmatprep.subr.mxu0 0.0
  %270 = vmatpush1.msra.mxu0 0.0
  %271 = vmatprep.mubr.f32.mxu0 0.0
  %272 = vmatmul.mubr.f32.gmra.mrb[0].mxu0 %v202
  %v273 = vpop.f32.mrb[0].mxu0
  %v274 = vadd.f32 %v193, %v273
  %v275 = vpop.f32.mrb[0].mxu0
  %276 = vmatprep.mubr.f32.mxu0 0.0
  %277 = vmatmul.mubr.f32.gmra.mrb[0].mxu0 %v205
  %v278 = vpop.f32.mrb[0].mxu0
  %v279 = vadd.f32 %v198, %v278
  %v280 = vpop.f32.mrb[0].mxu0
  %281 = vdwg.mxu0
  %v282 = vmax.f32 %v274, 0.0
  %v283 = vmax.f32 %v279, 0.0
  %v284 = vmul.f32 %v282, %v51
  %v285 = vmul.f32 %v283, %v51
  %v286 = vadd.f32 %v284, 0.0
  %v287 = vadd.f32 %v285, 0.0
  %s288 = scalar_lea.vmem %s1, 4
  %v289 = vld [vmem:[%s288] sm:$0xf]
  %vm290 = vcmp.ne.f32.partialorder %v289, -1.0
  %v291 = vsel %vm290, 1.0, 0.0
  %v292 = vsel %vm41, %v291, inf
  %v293 = vrot.slane %v292, 4
  %v294 = vmin.f32 %v292, %v293
  %v295 = vrot.slane %v294, 2
  %v296 = vmin.f32 %v294, %v295
  %v297 = vrot.slane %v296, 1
  %v298 = vmin.f32 %v296, %v297
  %vm299 = vcmp.gt.f32.partialorder %v298, 0.0
  %v300 = vsel %vm299, 1, 0
  %v301 = vcvt.s32.f32 %v300
  %v303 = vsel %vm93, %v289, 0
  %305 = vmatprep.subr.mxu0 0.0
  %306 = vmatpush1.msra.mxu0 %v303
  %307 = vmatprep.subr.mxu0 0.0
  %308 = vmatpush1.msra.mxu0 0.0
  %309 = vmatprep.subr.mxu0 0.0
  %310 = vmatpush1.msra.mxu0 0.0
  %311 = vmatprep.subr.mxu0 0.0
  %312 = vmatpush1.msra.mxu0 0.0
  %313 = vmatprep.subr.mxu0 0.0
  %314 = vmatpush1.msra.mxu0 0.0
  %315 = vmatprep.subr.mxu0 0.0
  %316 = vmatpush1.msra.mxu0 0.0
  %317 = vmatprep.subr.mxu0 0.0
  %318 = vmatpush1.msra.mxu0 0.0
  %319 = vmatprep.subr.mxu0 0.0
  %320 = vmatpush1.msra.mxu0 0.0
  %321 = vmatprep.subr.mxu0 0.0
  %322 = vmatpush1.msra.mxu0 0.0
  %323 = vmatprep.subr.mxu0 0.0
  %324 = vmatpush1.msra.mxu0 0.0
  %325 = vmatprep.subr.mxu0 0.0
  %326 = vmatpush1.msra.mxu0 0.0
  %327 = vmatprep.subr.mxu0 0.0
  %328 = vmatpush1.msra.mxu0 0.0
  %329 = vmatprep.subr.mxu0 0.0
  %330 = vmatpush1.msra.mxu0 0.0
  %331 = vmatprep.subr.mxu0 0.0
  %332 = vmatpush1.msra.mxu0 0.0
  %333 = vmatprep.subr.mxu0 0.0
  %334 = vmatpush1.msra.mxu0 0.0
  %335 = vmatprep.subr.mxu0 0.0
  %336 = vmatpush1.msra.mxu0 0.0
  %337 = vmatprep.subr.mxu0 0.0
  %338 = vmatpush1.msra.mxu0 0.0
  %339 = vmatprep.subr.mxu0 0.0
  %340 = vmatpush1.msra.mxu0 0.0
  %341 = vmatprep.subr.mxu0 0.0
  %342 = vmatpush1.msra.mxu0 0.0
  %343 = vmatprep.subr.mxu0 0.0
  %344 = vmatpush1.msra.mxu0 0.0
  %345 = vmatprep.subr.mxu0 0.0
  %346 = vmatpush1.msra.mxu0 0.0
  %347 = vmatprep.subr.mxu0 0.0
  %348 = vmatpush1.msra.mxu0 0.0
  %349 = vmatprep.subr.mxu0 0.0
  %350 = vmatpush1.msra.mxu0 0.0
  %351 = vmatprep.subr.mxu0 0.0
  %352 = vmatpush1.msra.mxu0 0.0
  %353 = vmatprep.subr.mxu0 0.0
  %354 = vmatpush1.msra.mxu0 0.0
  %355 = vmatprep.subr.mxu0 0.0
  %356 = vmatpush1.msra.mxu0 0.0
  %357 = vmatprep.subr.mxu0 0.0
  %358 = vmatpush1.msra.mxu0 0.0
  %359 = vmatprep.subr.mxu0 0.0
  %360 = vmatpush1.msra.mxu0 0.0
  %361 = vmatprep.subr.mxu0 0.0
  %362 = vmatpush1.msra.mxu0 0.0
  %363 = vmatprep.subr.mxu0 0.0
  %364 = vmatpush1.msra.mxu0 0.0
  %365 = vmatprep.subr.mxu0 0.0
  %366 = vmatpush1.msra.mxu0 0.0
  %367 = vmatprep.subr.mxu0 0.0
  %368 = vmatpush1.msra.mxu0 0.0
  %369 = vmatprep.mubr.f32.mxu0 0.0
  %370 = vmatmul.mubr.f32.gmra.mrb[0].mxu0 %v82
  %v371 = vpop.f32.mrb[0].mxu0
  %v372 = vadd.f32 %v63, %v371
  %v373 = vpop.f32.mrb[0].mxu0
  %374 = vmatprep.mubr.f32.mxu0 0.0
  %375 = vmatmul.mubr.f32.gmra.mrb[0].mxu0 %v85
  %v376 = vpop.f32.mrb[0].mxu0
  %v377 = vadd.f32 %v68, %v376
  %v378 = vpop.f32.mrb[0].mxu0
  %379 = vmatprep.mubr.f32.mxu0 0.0
  %380 = vmatmul.mubr.f32.gmra.mrb[0].mxu0 %v88
  %v381 = vpop.f32.mrb[0].mxu0
  %v382 = vadd.f32 %v73, %v381
  %v383 = vpop.f32.mrb[0].mxu0
  %384 = vmatprep.mubr.f32.mxu0 0.0
  %385 = vmatmul.mubr.f32.gmra.mrb[0].mxu0 %v91
  %v386 = vpop.f32.mrb[0].mxu0
  %v387 = vadd.f32 %v78, %v386
  %v388 = vpop.f32.mrb[0].mxu0
  %389 = vdwg.mxu0
  %v390 = vmax.f32 %v372, 0.0
  %v391 = vmax.f32 %v377, 0.0
  %v392 = vmax.f32 %v382, 0.0
  %v393 = vmax.f32 %v387, 0.0
  %394 = vmatprep.subr.mxu0 0.0
  %395 = vmatpush1.msra.mxu0 %v390
  %396 = vmatprep.subr.mxu0 0.0
  %397 = vmatpush1.msra.mxu0 %v391
  %398 = vmatprep.subr.mxu0 0.0
  %399 = vmatpush1.msra.mxu0 %v392
  %400 = vmatprep.subr.mxu0 0.0
  %401 = vmatpush1.msra.mxu0 %v393
  %402 = vmatprep.subr.mxu0 0.0
  %403 = vmatpush1.msra.mxu0 0.0
  %404 = vmatprep.subr.mxu0 0.0
  %405 = vmatpush1.msra.mxu0 0.0
  %406 = vmatprep.subr.mxu0 0.0
  %407 = vmatpush1.msra.mxu0 0.0
  %408 = vmatprep.subr.mxu0 0.0
  %409 = vmatpush1.msra.mxu0 0.0
  %410 = vmatprep.subr.mxu0 0.0
  %411 = vmatpush1.msra.mxu0 0.0
  %412 = vmatprep.subr.mxu0 0.0
  %413 = vmatpush1.msra.mxu0 0.0
  %414 = vmatprep.subr.mxu0 0.0
  %415 = vmatpush1.msra.mxu0 0.0
  %416 = vmatprep.subr.mxu0 0.0
  %417 = vmatpush1.msra.mxu0 0.0
  %418 = vmatprep.subr.mxu0 0.0
  %419 = vmatpush1.msra.mxu0 0.0
  %420 = vmatprep.subr.mxu0 0.0
  %421 = vmatpush1.msra.mxu0 0.0
  %422 = vmatprep.subr.mxu0 0.0
  %423 = vmatpush1.msra.mxu0 0.0
  %424 = vmatprep.subr.mxu0 0.0
  %425 = vmatpush1.msra.mxu0 0.0
  %426 = vmatprep.subr.mxu0 0.0
  %427 = vmatpush1.msra.mxu0 0.0
  %428 = vmatprep.subr.mxu0 0.0
  %429 = vmatpush1.msra.mxu0 0.0
  %430 = vmatprep.subr.mxu0 0.0
  %431 = vmatpush1.msra.mxu0 0.0
  %432 = vmatprep.subr.mxu0 0.0
  %433 = vmatpush1.msra.mxu0 0.0
  %434 = vmatprep.subr.mxu0 0.0
  %435 = vmatpush1.msra.mxu0 0.0
  %436 = vmatprep.subr.mxu0 0.0
  %437 = vmatpush1.msra.mxu0 0.0
  %438 = vmatprep.subr.mxu0 0.0
  %439 = vmatpush1.msra.mxu0 0.0
  %440 = vmatprep.subr.mxu0 0.0
  %441 = vmatpush1.msra.mxu0 0.0
  %442 = vmatprep.subr.mxu0 0.0
  %443 = vmatpush1.msra.mxu0 0.0
  %444 = vmatprep.subr.mxu0 0.0
  %445 = vmatpush1.msra.mxu0 0.0
  %446 = vmatprep.subr.mxu0 0.0
  %447 = vmatpush1.msra.mxu0 0.0
  %448 = vmatprep.subr.mxu0 0.0
  %449 = vmatpush1.msra.mxu0 0.0
  %450 = vmatprep.subr.mxu0 0.0
  %451 = vmatpush1.msra.mxu0 0.0
  %452 = vmatprep.subr.mxu0 0.0
  %453 = vmatpush1.msra.mxu0 0.0
  %454 = vmatprep.subr.mxu0 0.0
  %455 = vmatpush1.msra.mxu0 0.0
  %456 = vmatprep.subr.mxu0 0.0
  %457 = vmatpush1.msra.mxu0 0.0
  %458 = vmatprep.mubr.f32.mxu0 0.0
  %459 = vmatmul.mubr.f32.gmra.mrb[0].mxu0 %v202
  %v460 = vpop.f32.mrb[0].mxu0
  %v461 = vadd.f32 %v193, %v460
  %v462 = vpop.f32.mrb[0].mxu0
  %463 = vmatprep.mubr.f32.mxu0 0.0
  %464 = vmatmul.mubr.f32.gmra.mrb[0].mxu0 %v205
  %v465 = vpop.f32.mrb[0].mxu0
  %v466 = vadd.f32 %v198, %v465
  %v467 = vpop.f32.mrb[0].mxu0
  %468 = vdwg.mxu0
  %v469 = vmax.f32 %v461, 0.0
  %v470 = vmax.f32 %v466, 0.0
  %v471 = vmul.f32 %v469, %v301
  %v472 = vmul.f32 %v470, %v301
  %v473 = vadd.f32 %v286, %v471
  %v474 = vadd.f32 %v287, %v472
  %s475 = scalar_lea.vmem %s1, 8
  %v476 = vld [vmem:[%s475] sm:$0xf]
  %vm477 = vcmp.ne.f32.partialorder %v476, -1.0
  %v478 = vsel %vm477, 1.0, 0.0
  %v479 = vsel %vm41, %v478, inf
  %v480 = vrot.slane %v479, 4
  %v481 = vmin.f32 %v479, %v480
  %v482 = vrot.slane %v481, 2
  %v483 = vmin.f32 %v481, %v482
  %v484 = vrot.slane %v483, 1
  %v485 = vmin.f32 %v483, %v484
  %vm486 = vcmp.gt.f32.partialorder %v485, 0.0
  %v487 = vsel %vm486, 1, 0
  %v488 = vcvt.s32.f32 %v487
  %v490 = vsel %vm93, %v476, 0
  %492 = vmatprep.subr.mxu0 0.0
  %493 = vmatpush1.msra.mxu0 %v490
  %494 = vmatprep.subr.mxu0 0.0
  %495 = vmatpush1.msra.mxu0 0.0
  %496 = vmatprep.subr.mxu0 0.0
  %497 = vmatpush1.msra.mxu0 0.0
  %498 = vmatprep.subr.mxu0 0.0
  %499 = vmatpush1.msra.mxu0 0.0
  %500 = vmatprep.subr.mxu0 0.0
  %501 = vmatpush1.msra.mxu0 0.0
  %502 = vmatprep.subr.mxu0 0.0
  %503 = vmatpush1.msra.mxu0 0.0
  %504 = vmatprep.subr.mxu0 0.0
  %505 = vmatpush1.msra.mxu0 0.0
  %506 = vmatprep.subr.mxu0 0.0
  %507 = vmatpush1.msra.mxu0 0.0
  %508 = vmatprep.subr.mxu0 0.0
  %509 = vmatpush1.msra.mxu0 0.0
  %510 = vmatprep.subr.mxu0 0.0
  %511 = vmatpush1.msra.mxu0 0.0
  %512 = vmatprep.subr.mxu0 0.0
  %513 = vmatpush1.msra.mxu0 0.0
  %514 = vmatprep.subr.mxu0 0.0
  %515 = vmatpush1.msra.mxu0 0.0
  %516 = vmatprep.subr.mxu0 0.0
  %517 = vmatpush1.msra.mxu0 0.0
  %518 = vmatprep.subr.mxu0 0.0
  %519 = vmatpush1.msra.mxu0 0.0
  %520 = vmatprep.subr.mxu0 0.0
  %521 = vmatpush1.msra.mxu0 0.0
  %522 = vmatprep.subr.mxu0 0.0
  %523 = vmatpush1.msra.mxu0 0.0
  %524 = vmatprep.subr.mxu0 0.0
  %525 = vmatpush1.msra.mxu0 0.0
  %526 = vmatprep.subr.mxu0 0.0
  %527 = vmatpush1.msra.mxu0 0.0
  %528 = vmatprep.subr.mxu0 0.0
  %529 = vmatpush1.msra.mxu0 0.0
  %530 = vmatprep.subr.mxu0 0.0
  %531 = vmatpush1.msra.mxu0 0.0
  %532 = vmatprep.subr.mxu0 0.0
  %533 = vmatpush1.msra.mxu0 0.0
  %534 = vmatprep.subr.mxu0 0.0
  %535 = vmatpush1.msra.mxu0 0.0
  %536 = vmatprep.subr.mxu0 0.0
  %537 = vmatpush1.msra.mxu0 0.0
  %538 = vmatprep.subr.mxu0 0.0
  %539 = vmatpush1.msra.mxu0 0.0
  %540 = vmatprep.subr.mxu0 0.0
  %541 = vmatpush1.msra.mxu0 0.0
  %542 = vmatprep.subr.mxu0 0.0
  %543 = vmatpush1.msra.mxu0 0.0
  %544 = vmatprep.subr.mxu0 0.0
  %545 = vmatpush1.msra.mxu0 0.0
  %546 = vmatprep.subr.mxu0 0.0
  %547 = vmatpush1.msra.mxu0 0.0
  %548 = vmatprep.subr.mxu0 0.0
  %549 = vmatpush1.msra.mxu0 0.0
  %550 = vmatprep.subr.mxu0 0.0
  %551 = vmatpush1.msra.mxu0 0.0
  %552 = vmatprep.subr.mxu0 0.0
  %553 = vmatpush1.msra.mxu0 0.0
  %554 = vmatprep.subr.mxu0 0.0
  %555 = vmatpush1.msra.mxu0 0.0
  %556 = vmatprep.mubr.f32.mxu0 0.0
  %557 = vmatmul.mubr.f32.gmra.mrb[0].mxu0 %v82
  %v558 = vpop.f32.mrb[0].mxu0
  %v559 = vadd.f32 %v63, %v558
  %v560 = vpop.f32.mrb[0].mxu0
  %561 = vmatprep.mubr.f32.mxu0 0.0
  %562 = vmatmul.mubr.f32.gmra.mrb[0].mxu0 %v85
  %v563 = vpop.f32.mrb[0].mxu0
  %v564 = vadd.f32 %v68, %v563
  %v565 = vpop.f32.mrb[0].mxu0
  %566 = vmatprep.mubr.f32.mxu0 0.0
  %567 = vmatmul.mubr.f32.gmra.mrb[0].mxu0 %v88
  %v568 = vpop.f32.mrb[0].mxu0
  %v569 = vadd.f32 %v73, %v568
  %v570 = vpop.f32.mrb[0].mxu0
  %571 = vmatprep.mubr.f32.mxu0 0.0
  %572 = vmatmul.mubr.f32.gmra.mrb[0].mxu0 %v91
  %v573 = vpop.f32.mrb[0].mxu0
  %v574 = vadd.f32 %v78, %v573
  %v575 = vpop.f32.mrb[0].mxu0
  %576 = vdwg.mxu0
  %v577 = vmax.f32 %v559, 0.0
  %v578 = vmax.f32 %v564, 0.0
  %v579 = vmax.f32 %v569, 0.0
  %v580 = vmax.f32 %v574, 0.0
  %581 = vmatprep.subr.mxu0 0.0
  %582 = vmatpush1.msra.mxu0 %v577
  %583 = vmatprep.subr.mxu0 0.0
  %584 = vmatpush1.msra.mxu0 %v578
  %585 = vmatprep.subr.mxu0 0.0
  %586 = vmatpush1.msra.mxu0 %v579
  %587 = vmatprep.subr.mxu0 0.0
  %588 = vmatpush1.msra.mxu0 %v580
  %589 = vmatprep.subr.mxu0 0.0
  %590 = vmatpush1.msra.mxu0 0.0
  %591 = vmatprep.subr.mxu0 0.0
  %592 = vmatpush1.msra.mxu0 0.0
  %593 = vmatprep.subr.mxu0 0.0
  %594 = vmatpush1.msra.mxu0 0.0
  %595 = vmatprep.subr.mxu0 0.0
  %596 = vmatpush1.msra.mxu0 0.0
  %597 = vmatprep.subr.mxu0 0.0
  %598 = vmatpush1.msra.mxu0 0.0
  %599 = vmatprep.subr.mxu0 0.0
  %600 = vmatpush1.msra.mxu0 0.0
  %601 = vmatprep.subr.mxu0 0.0
  %602 = vmatpush1.msra.mxu0 0.0
  %603 = vmatprep.subr.mxu0 0.0
  %604 = vmatpush1.msra.mxu0 0.0
  %605 = vmatprep.subr.mxu0 0.0
  %606 = vmatpush1.msra.mxu0 0.0
  %607 = vmatprep.subr.mxu0 0.0
  %608 = vmatpush1.msra.mxu0 0.0
  %609 = vmatprep.subr.mxu0 0.0
  %610 = vmatpush1.msra.mxu0 0.0
  %611 = vmatprep.subr.mxu0 0.0
  %612 = vmatpush1.msra.mxu0 0.0
  %613 = vmatprep.subr.mxu0 0.0
  %614 = vmatpush1.msra.mxu0 0.0
  %615 = vmatprep.subr.mxu0 0.0
  %616 = vmatpush1.msra.mxu0 0.0
  %617 = vmatprep.subr.mxu0 0.0
  %618 = vmatpush1.msra.mxu0 0.0
  %619 = vmatprep.subr.mxu0 0.0
  %620 = vmatpush1.msra.mxu0 0.0
  %621 = vmatprep.subr.mxu0 0.0
  %622 = vmatpush1.msra.mxu0 0.0
  %623 = vmatprep.subr.mxu0 0.0
  %624 = vmatpush1.msra.mxu0 0.0
  %625 = vmatprep.subr.mxu0 0.0
  %626 = vmatpush1.msra.mxu0 0.0
  %627 = vmatprep.subr.mxu0 0.0
  %628 = vmatpush1.msra.mxu0 0.0
  %629 = vmatprep.subr.mxu0 0.0
  %630 = vmatpush1.msra.mxu0 0.0
  %631 = vmatprep.subr.mxu0 0.0
  %632 = vmatpush1.msra.mxu0 0.0
  %633 = vmatprep.subr.mxu0 0.0
  %634 = vmatpush1.msra.mxu0 0.0
  %635 = vmatprep.subr.mxu0 0.0
  %636 = vmatpush1.msra.mxu0 0.0
  %637 = vmatprep.subr.mxu0 0.0
  %638 = vmatpush1.msra.mxu0 0.0
  %639 = vmatprep.subr.mxu0 0.0
  %640 = vmatpush1.msra.mxu0 0.0
  %641 = vmatprep.subr.mxu0 0.0
  %642 = vmatpush1.msra.mxu0 0.0
  %643 = vmatprep.subr.mxu0 0.0
  %644 = vmatpush1.msra.mxu0 0.0
  %645 = vmatprep.mubr.f32.mxu0 0.0
  %646 = vmatmul.mubr.f32.gmra.mrb[0].mxu0 %v202
  %v647 = vpop.f32.mrb[0].mxu0
  %v648 = vadd.f32 %v193, %v647
  %v649 = vpop.f32.mrb[0].mxu0
  %650 = vmatprep.mubr.f32.mxu0 0.0
  %651 = vmatmul.mubr.f32.gmra.mrb[0].mxu0 %v205
  %v652 = vpop.f32.mrb[0].mxu0
  %v653 = vadd.f32 %v198, %v652
  %v654 = vpop.f32.mrb[0].mxu0
  %655 = vdwg.mxu0
  %v656 = vmax.f32 %v648, 0.0
  %v657 = vmax.f32 %v653, 0.0
  %v658 = vmul.f32 %v656, %v488
  %v659 = vmul.f32 %v657, %v488
  %v660 = vadd.f32 %v473, %v658
  %v661 = vadd.f32 %v474, %v659
  %v662 = vld [vmem:[%s6] sm:$0xff]
  %v663 = vld [vmem:[%s6 + $0x8] sm:$0xff]
  %v664 = vld [vmem:[%s6 + $0x10] sm:$0xff]
  %v665 = vld [vmem:[%s6 + $0x18] sm:$0xff]
  %v666 = vld [vmem:[%s0] sm:$0xf]
  %v667 = vld [vmem:[%s7] sm:$0xff]
  %v668 = vld [vmem:[%s7 + $0x8] sm:$0xff]
  %v669 = vld [vmem:[%s7 + $0x10] sm:$0xff]
  %v670 = vld [vmem:[%s7 + $0x18] sm:$0xff]
  %vm671 = vcmask 105472
  %v673 = vsel %vm671, %v667, 0
  %v676 = vsel %vm671, %v668, 0
  %v679 = vsel %vm671, %v669, 0
  %v682 = vsel %vm671, %v670, 0
  %vm684 = vcmask 1044480
  %v686 = vsel %vm684, %v661, 0
  %688 = vmatprep.subr.mxu0 0.0
  %689 = vmatpush1.msra.mxu0 %v660
  %690 = vmatprep.subr.mxu0 0.0
  %691 = vmatpush1.msra.mxu0 %v686
  %692 = vmatprep.subr.mxu0 0.0
  %693 = vmatpush1.msra.mxu0 0.0
  %694 = vmatprep.subr.mxu0 0.0
  %695 = vmatpush1.msra.mxu0 0.0
  %696 = vmatprep.subr.mxu0 0.0
  %697 = vmatpush1.msra.mxu0 0.0
  %698 = vmatprep.subr.mxu0 0.0
  %699 = vmatpush1.msra.mxu0 0.0
  %700 = vmatprep.subr.mxu0 0.0
  %701 = vmatpush1.msra.mxu0 0.0
  %702 = vmatprep.subr.mxu0 0.0
  %703 = vmatpush1.msra.mxu0 0.0
  %704 = vmatprep.subr.mxu0 0.0
  %705 = vmatpush1.msra.mxu0 0.0
  %706 = vmatprep.subr.mxu0 0.0
  %707 = vmatpush1.msra.mxu0 0.0
  %708 = vmatprep.subr.mxu0 0.0
  %709 = vmatpush1.msra.mxu0 0.0
  %710 = vmatprep.subr.mxu0 0.0
  %711 = vmatpush1.msra.mxu0 0.0
  %712 = vmatprep.subr.mxu0 0.0
  %713 = vmatpush1.msra.mxu0 0.0
  %714 = vmatprep.subr.mxu0 0.0
  %715 = vmatpush1.msra.mxu0 0.0
  %716 = vmatprep.subr.mxu0 0.0
  %717 = vmatpush1.msra.mxu0 0.0
  %718 = vmatprep.subr.mxu0 0.0
  %719 = vmatpush1.msra.mxu0 0.0
  %720 = vmatprep.subr.mxu0 0.0
  %721 = vmatpush1.msra.mxu0 0.0
  %722 = vmatprep.subr.mxu0 0.0
  %723 = vmatpush1.msra.mxu0 0.0
  %724 = vmatprep.subr.mxu0 0.0
  %725 = vmatpush1.msra.mxu0 0.0
  %726 = vmatprep.subr.mxu0 0.0
  %727 = vmatpush1.msra.mxu0 0.0
  %728 = vmatprep.subr.mxu0 0.0
  %729 = vmatpush1.msra.mxu0 0.0
  %730 = vmatprep.subr.mxu0 0.0
  %731 = vmatpush1.msra.mxu0 0.0
  %732 = vmatprep.subr.mxu0 0.0
  %733 = vmatpush1.msra.mxu0 0.0
  %734 = vmatprep.subr.mxu0 0.0
  %735 = vmatpush1.msra.mxu0 0.0
  %736 = vmatprep.subr.mxu0 0.0
  %737 = vmatpush1.msra.mxu0 0.0
  %738 = vmatprep.subr.mxu0 0.0
  %739 = vmatpush1.msra.mxu0 0.0
  %740 = vmatprep.subr.mxu0 0.0
  %741 = vmatpush1.msra.mxu0 0.0
  %742 = vmatprep.subr.mxu0 0.0
  %743 = vmatpush1.msra.mxu0 0.0
  %744 = vmatprep.subr.mxu0 0.0
  %745 = vmatpush1.msra.mxu0 0.0
  %746 = vmatprep.subr.mxu0 0.0
  %747 = vmatpush1.msra.mxu0 0.0
  %748 = vmatprep.subr.mxu0 0.0
  %749 = vmatpush1.msra.mxu0 0.0
  %750 = vmatprep.subr.mxu0 0.0
  %751 = vmatpush1.msra.mxu0 0.0
  %752 = vmatprep.mubr.f32.mxu0 0.0
  %753 = vmatmul.mubr.f32.gmra.mrb[0].mxu0 %v673
  %v754 = vpop.f32.mrb[0].mxu0
  %v755 = vadd.f32 0.0, %v754
  %v756 = vpop.f32.mrb[0].mxu0
  %757 = vmatprep.mubr.f32.mxu0 0.0
  %758 = vmatmul.mubr.f32.gmra.mrb[0].mxu0 %v676
  %v759 = vpop.f32.mrb[0].mxu0
  %v760 = vadd.f32 0.0, %v759
  %v761 = vpop.f32.mrb[0].mxu0
  %762 = vmatprep.mubr.f32.mxu0 0.0
  %763 = vmatmul.mubr.f32.gmra.mrb[0].mxu0 %v679
  %v764 = vpop.f32.mrb[0].mxu0
  %v765 = vadd.f32 0.0, %v764
  %v766 = vpop.f32.mrb[0].mxu0
  %767 = vmatprep.mubr.f32.mxu0 0.0
  %768 = vmatmul.mubr.f32.gmra.mrb[0].mxu0 %v682
  %v769 = vpop.f32.mrb[0].mxu0
  %v770 = vadd.f32 0.0, %v769
  %v771 = vpop.f32.mrb[0].mxu0
  %772 = vdwg.mxu0
  %v774 = vsel %vm80, %v662, 0
  %v777 = vsel %vm80, %v663, 0
  %v780 = vsel %vm80, %v664, 0
  %v783 = vsel %vm80, %v665, 0
  %v786 = vsel %vm93, %v666, 0
  %788 = vmatprep.subr.mxu0 0.0
  %789 = vmatpush1.msra.mxu0 %v786
  %790 = vmatprep.subr.mxu0 0.0
  %791 = vmatpush1.msra.mxu0 0.0
  %792 = vmatprep.subr.mxu0 0.0
  %793 = vmatpush1.msra.mxu0 0.0
  %794 = vmatprep.subr.mxu0 0.0
  %795 = vmatpush1.msra.mxu0 0.0
  %796 = vmatprep.subr.mxu0 0.0
  %797 = vmatpush1.msra.mxu0 0.0
  %798 = vmatprep.subr.mxu0 0.0
  %799 = vmatpush1.msra.mxu0 0.0
  %800 = vmatprep.subr.mxu0 0.0
  %801 = vmatpush1.msra.mxu0 0.0
  %802 = vmatprep.subr.mxu0 0.0
  %803 = vmatpush1.msra.mxu0 0.0
  %804 = vmatprep.subr.mxu0 0.0
  %805 = vmatpush1.msra.mxu0 0.0
  %806 = vmatprep.subr.mxu0 0.0
  %807 = vmatpush1.msra.mxu0 0.0
  %808 = vmatprep.subr.mxu0 0.0
  %809 = vmatpush1.msra.mxu0 0.0
  %810 = vmatprep.subr.mxu0 0.0
  %811 = vmatpush1.msra.mxu0 0.0
  %812 = vmatprep.subr.mxu0 0.0
  %813 = vmatpush1.msra.mxu0 0.0
  %814 = vmatprep.subr.mxu0 0.0
  %815 = vmatpush1.msra.mxu0 0.0
  %816 = vmatprep.subr.mxu0 0.0
  %817 = vmatpush1.msra.mxu0 0.0
  %818 = vmatprep.subr.mxu0 0.0
  %819 = vmatpush1.msra.mxu0 0.0
  %820 = vmatprep.subr.mxu0 0.0
  %821 = vmatpush1.msra.mxu0 0.0
  %822 = vmatprep.subr.mxu0 0.0
  %823 = vmatpush1.msra.mxu0 0.0
  %824 = vmatprep.subr.mxu0 0.0
  %825 = vmatpush1.msra.mxu0 0.0
  %826 = vmatprep.subr.mxu0 0.0
  %827 = vmatpush1.msra.mxu0 0.0
  %828 = vmatprep.subr.mxu0 0.0
  %829 = vmatpush1.msra.mxu0 0.0
  %830 = vmatprep.subr.mxu0 0.0
  %831 = vmatpush1.msra.mxu0 0.0
  %832 = vmatprep.subr.mxu0 0.0
  %833 = vmatpush1.msra.mxu0 0.0
  %834 = vmatprep.subr.mxu0 0.0
  %835 = vmatpush1.msra.mxu0 0.0
  %836 = vmatprep.subr.mxu0 0.0
  %837 = vmatpush1.msra.mxu0 0.0
  %838 = vmatprep.subr.mxu0 0.0
  %839 = vmatpush1.msra.mxu0 0.0
  %840 = vmatprep.subr.mxu0 0.0
  %841 = vmatpush1.msra.mxu0 0.0
  %842 = vmatprep.subr.mxu0 0.0
  %843 = vmatpush1.msra.mxu0 0.0
  %844 = vmatprep.subr.mxu0 0.0
  %845 = vmatpush1.msra.mxu0 0.0
  %846 = vmatprep.subr.mxu0 0.0
  %847 = vmatpush1.msra.mxu0 0.0
  %848 = vmatprep.subr.mxu0 0.0
  %849 = vmatpush1.msra.mxu0 0.0
  %850 = vmatprep.subr.mxu0 0.0
  %851 = vmatpush1.msra.mxu0 0.0
  %852 = vmatprep.mubr.f32.mxu0 0.0
  %853 = vmatmul.mubr.f32.gmra.mrb[0].mxu0 %v774
  %v854 = vpop.f32.mrb[0].mxu0
  %v855 = vadd.f32 %v755, %v854
  %v856 = vpop.f32.mrb[0].mxu0
  %857 = vmatprep.mubr.f32.mxu0 0.0
  %858 = vmatmul.mubr.f32.gmra.mrb[0].mxu0 %v777
  %v859 = vpop.f32.mrb[0].mxu0
  %v860 = vadd.f32 %v760, %v859
  %v861 = vpop.f32.mrb[0].mxu0
  %862 = vmatprep.mubr.f32.mxu0 0.0
  %863 = vmatmul.mubr.f32.gmra.mrb[0].mxu0 %v780
  %v864 = vpop.f32.mrb[0].mxu0
  %v865 = vadd.f32 %v765, %v864
  %v866 = vpop.f32.mrb[0].mxu0
  %867 = vmatprep.mubr.f32.mxu0 0.0
  %868 = vmatmul.mubr.f32.gmra.mrb[0].mxu0 %v783
  %v869 = vpop.f32.mrb[0].mxu0
  %v870 = vadd.f32 %v770, %v869
  %v871 = vpop.f32.mrb[0].mxu0
  %872 = vdwg.mxu0
  %v873 = vld [vmem:[%s8] sm:$0xff]
  %v874 = vld [vmem:[%s8 + $0x8] sm:$0xff]
  %v875 = vld [vmem:[%s8 + $0x10] sm:$0xff]
  %v876 = vld [vmem:[%s8 + $0x18] sm:$0xff]
  %878 = vset.pattern.permute.xlu0 0
  %879 = vperm.xlu0 %878, %v873
  %v880 = vpop.permute.xlu0 %879
  %883 = vset.pattern.permute.xlu0 0
  %884 = vperm.xlu0 %883, %v874
  %v885 = vpop.permute.xlu0 %884
  %888 = vset.pattern.permute.xlu0 0
  %889 = vperm.xlu0 %888, %v875
  %v890 = vpop.permute.xlu0 %889
  %893 = vset.pattern.permute.xlu0 0
  %894 = vperm.xlu0 %893, %v876
  %v895 = vpop.permute.xlu0 %894
  %v897 = vadd.f32 %v855, %v880
  %v898 = vadd.f32 %v860, %v885
  %v899 = vadd.f32 %v865, %v890
  %v900 = vadd.f32 %v870, %v895
  %v901 = vmax.f32 %v897, 0.0
  %v902 = vmax.f32 %v898, 0.0
  %v903 = vmax.f32 %v899, 0.0
  %v904 = vmax.f32 %v900, 0.0
  %v905 = vld [vmem:[%s9] sm:$0x1f]
  %v906 = vld [vmem:[%s10] sm:$0x1f]
  %908 = vset.pattern.permute.xlu0 0
  %909 = vperm.xlu0 %908, %v906
  %v910 = vpop.permute.xlu0 %909
  %v913 = vsel %vm200, %v905, 0
  %915 = vmatprep.subr.mxu0 0.0
  %916 = vmatpush1.msra.mxu0 %v901
  %917 = vmatprep.subr.mxu0 0.0
  %918 = vmatpush1.msra.mxu0 %v902
  %919 = vmatprep.subr.mxu0 0.0
  %920 = vmatpush1.msra.mxu0 %v903
  %921 = vmatprep.subr.mxu0 0.0
  %922 = vmatpush1.msra.mxu0 %v904
  %923 = vmatprep.subr.mxu0 0.0
  %924 = vmatpush1.msra.mxu0 0.0
  %925 = vmatprep.subr.mxu0 0.0
  %926 = vmatpush1.msra.mxu0 0.0
  %927 = vmatprep.subr.mxu0 0.0
  %928 = vmatpush1.msra.mxu0 0.0
  %929 = vmatprep.subr.mxu0 0.0
  %930 = vmatpush1.msra.mxu0 0.0
  %931 = vmatprep.subr.mxu0 0.0
  %932 = vmatpush1.msra.mxu0 0.0
  %933 = vmatprep.subr.mxu0 0.0
  %934 = vmatpush1.msra.mxu0 0.0
  %935 = vmatprep.subr.mxu0 0.0
  %936 = vmatpush1.msra.mxu0 0.0
  %937 = vmatprep.subr.mxu0 0.0
  %938 = vmatpush1.msra.mxu0 0.0
  %939 = vmatprep.subr.mxu0 0.0
  %940 = vmatpush1.msra.mxu0 0.0
  %941 = vmatprep.subr.mxu0 0.0
  %942 = vmatpush1.msra.mxu0 0.0
  %943 = vmatprep.subr.mxu0 0.0
  %944 = vmatpush1.msra.mxu0 0.0
  %945 = vmatprep.subr.mxu0 0.0
  %946 = vmatpush1.msra.mxu0 0.0
  %947 = vmatprep.subr.mxu0 0.0
  %948 = vmatpush1.msra.mxu0 0.0
  %949 = vmatprep.subr.mxu0 0.0
  %950 = vmatpush1.msra.mxu0 0.0
  %951 = vmatprep.subr.mxu0 0.0
  %952 = vmatpush1.msra.mxu0 0.0
  %953 = vmatprep.subr.mxu0 0.0
  %954 = vmatpush1.msra.mxu0 0.0
  %955 = vmatprep.subr.mxu0 0.0
  %956 = vmatpush1.msra.mxu0 0.0
  %957 = vmatprep.subr.mxu0 0.0
  %958 = vmatpush1.msra.mxu0 0.0
  %959 = vmatprep.subr.mxu0 0.0
  %960 = vmatpush1.msra.mxu0 0.0
  %961 = vmatprep.subr.mxu0 0.0
  %962 = vmatpush1.msra.mxu0 0.0
  %963 = vmatprep.subr.mxu0 0.0
  %964 = vmatpush1.msra.mxu0 0.0
  %965 = vmatprep.subr.mxu0 0.0
  %966 = vmatpush1.msra.mxu0 0.0
  %967 = vmatprep.subr.mxu0 0.0
  %968 = vmatpush1.msra.mxu0 0.0
  %969 = vmatprep.subr.mxu0 0.0
  %970 = vmatpush1.msra.mxu0 0.0
  %971 = vmatprep.subr.mxu0 0.0
  %972 = vmatpush1.msra.mxu0 0.0
  %973 = vmatprep.subr.mxu0 0.0
  %974 = vmatpush1.msra.mxu0 0.0
  %975 = vmatprep.subr.mxu0 0.0
  %976 = vmatpush1.msra.mxu0 0.0
  %977 = vmatprep.subr.mxu0 0.0
  %978 = vmatpush1.msra.mxu0 0.0
  %979 = vmatprep.mubr.f32.mxu0 0.0
  %980 = vmatmul.mubr.f32.gmra.mrb[0].mxu0 %v913
  %v981 = vpop.f32.mrb[0].mxu0
  %v982 = vadd.f32 %v910, %v981
  %v983 = vpop.f32.mrb[0].mxu0
  %984 = vdwg.mxu0
  %vm985 = vcmask 12288
  %986 = vst.msk [vmem:[%s11] sm:$0x1f] %vm985, %v982
  // Predicated region
  $region46: #{q_net_forward.1} parent=0 // pred_check
    _
  $region47: #{q_net_forward.1} parent=0 // pred_check_branch
    %988 = sbr.rel (0) target = $region49
  $region48: #{q_net_forward.1} parent=0 // pred_region
    _
  $region49: #{q_net_forward.1} parent=0 // pred_fallthru
    _
  // Predicated region
  $region50: #{q_net_forward.1} parent=0 // pred_check
    _
  $region51: #{q_net_forward.1} parent=0 // pred_check_branch
    %990 = sbr.rel (0) target = $region53
  $region52: #{q_net_forward.1} parent=0 // pred_region
    _
  $region53: #{q_net_forward.1} parent=0 // pred_fallthru
    _

</llo_original>
